<compile_context>
chip_gen: v5e
topology: v5e:2x2
jax: 0.10.0
libtpu: 0.0.40
codegen_flags: <defaults>
</compile_context>

<pallas_src>
import functools

import jax
import jax.numpy as jnp
from jax.experimental import pallas as pl
from jax.experimental.pallas import tpu as pltpu


# ----------------------------------------------------------------------------
# Fused MLP kernel: all layers computed per batch tile (weights fully resident).
# ----------------------------------------------------------------------------
def mlp_kernel(*refs, activations, matmul_dtype):
    """refs = (x_ref, w0, b0, w1, b1, ..., o_ref); one (TILE_B, feat) batch tile."""
    x_ref = refs[0]
    o_ref = refs[-1]
    param_refs = refs[1:-1]
    num_layers = len(param_refs) // 2

    h = x_ref[...]                                    # (TILE_B, in) matmul_dtype
    for i in range(num_layers):
        w = param_refs[2 * i][...]                    # (in_i, out_i) matmul_dtype
        b = param_refs[2 * i + 1][...]                # (1, out_i) f32 -> broadcasts
        h = jnp.dot(h.astype(matmul_dtype), w,
                    preferred_element_type=jnp.float32) + b
        if activations[i] == "leaky_relu":
            h = jnp.maximum(h, 0.1 * h)               # LeakyReLU(0.1): mul + max
        # Dropout(p): identity in eval/inference mode.
        # TODO(synk): training-mode dropout would use pltpu.prng_random_bits.
    o_ref[...] = h.astype(o_ref.dtype)


def mlp_forward(x, params, activations, *, tile_b=1024, matmul_dtype=None):
    """x: (B, nodes_info[0]). params: list of (W (in,out) f32, b (1,out) f32).

    matmul_dtype: dtype fed to the MXU (jnp.bfloat16 recommended on v6e/v7x;
    accumulation stays f32). Defaults to x.dtype.
    """
    out_dtype = x.dtype
    if matmul_dtype is None:
        matmul_dtype = x.dtype
    mm_itemsize = jnp.dtype(matmul_dtype).itemsize
    out_itemsize = jnp.dtype(out_dtype).itemsize

    B, in_dim = x.shape
    out_dim = params[-1][0].shape[1]

    # --- Lane-dense output slab: pad last layer's output columns to 128n. ----
    LANE = 128
    out_pad = ((out_dim + LANE - 1) // LANE) * LANE
    w_last, b_last = params[-1]
    if out_pad != out_dim:
        w_last = jnp.pad(w_last, ((0, 0), (0, out_pad - out_dim)))
        b_last = jnp.pad(b_last, ((0, 0), (0, out_pad - out_dim)))
    layer_params = list(params[:-1]) + [(w_last, b_last)]

    # --- Cast matmul operands in the wrapper (halves HBM bytes when bf16). ---
    x_mm = x.astype(matmul_dtype)
    layer_params = [(w.astype(matmul_dtype), b.astype(jnp.float32))
                    for (w, b) in layer_params]

    # --- VMEM-aware batch tiling: sublane-aligned, fits scoped VMEM budget. --
    sub = 16 if mm_itemsize < 4 else 8
    param_bytes = sum(w.size * w.dtype.itemsize + b.size * b.dtype.itemsize
                      for (w, b) in layer_params)
    # Per-row VMEM cost: double-buffered x + out tiles, plus the widest f32
    # intermediate activation produced inside the kernel body.
    widest = max([in_dim] + [w.shape[1] for (w, _) in layer_params])
    row_bytes = 2 * (in_dim * mm_itemsize + out_pad * out_itemsize) + widest * 4
    VMEM_BUDGET = 24 * 1024 * 1024                 # stay well under v7x default
    tile_cap = max(sub, (VMEM_BUDGET - param_bytes) // max(row_bytes, 1))

    b_sub = ((B + sub - 1) // sub) * sub           # batch rounded up to sublanes
    tile_b = min(tile_b, tile_cap, b_sub)
    tile_b = max(sub, (tile_b // sub) * sub)       # sublane-aligned batch tile
    b_pad = pl.cdiv(b_sub, tile_b) * tile_b
    if b_pad != B:
        x_mm = jnp.pad(x_mm, ((0, b_pad - B), (0, 0)))
    grid = (pl.cdiv(b_pad, tile_b),)

    # Only raise the scoped VMEM limit if this config actually needs it.
    vmem_needed = int(2 * param_bytes + tile_b * row_bytes)
    vmem_limit = None
    if vmem_needed > 28 * 1024 * 1024:
        vmem_limit = min(int(vmem_needed * 1.25), 120 * 1024 * 1024)

    # --- Specs: x/out tiled over the batch grid; params VMEM-resident. -------
    flat = []
    in_specs = [pl.BlockSpec((tile_b, in_dim), lambda i: (i, 0))]
    for (w, b) in layer_params:
        flat.extend([w, b])
        in_specs.append(pl.BlockSpec(w.shape, lambda i: (0, 0)))
        in_specs.append(pl.BlockSpec(b.shape, lambda i: (0, 0)))

    flops = 2 * b_pad * sum(w.shape[0] * w.shape[1] for (w, _) in layer_params)
    bytes_accessed = int(
        x_mm.size * x_mm.dtype.itemsize
        + param_bytes
        + b_pad * out_pad * out_itemsize)

    kernel = functools.partial(
        mlp_kernel, activations=tuple(activations), matmul_dtype=matmul_dtype)

    out = pl.pallas_call(
        kernel,
        out_shape=jax.ShapeDtypeStruct((b_pad, out_pad), out_dtype),
        grid=grid,
        in_specs=in_specs,
        out_specs=pl.BlockSpec((tile_b, out_pad), lambda i: (i, 0)),
        compiler_params=pltpu.CompilerParams(
            dimension_semantics=("parallel",),       # 2-TC sharding on v7x
            vmem_limit_bytes=vmem_limit),
        cost_estimate=pl.CostEstimate(
            flops=flops, transcendentals=0, bytes_accessed=bytes_accessed),
    )(x_mm, *flat)

    return out[:B, :out_dim]


# ----------------------------------------------------------------------------
# Deterministic parameter construction (matches MLP.reset_parameters()).
# ----------------------------------------------------------------------------
def init_mlp_params(key, nodes_info):
    params = []
    a = 0.1  # leaky_relu negative slope used in kaiming init
    for i in range(len(nodes_info) - 1):
        fan_in, fan_out = nodes_info[i], nodes_info[i + 1]
        key, kw, kb = jax.random.split(key, 3)
        gain = (2.0 / (1.0 + a * a)) ** 0.5
        bound = gain * (3.0 / fan_in) ** 0.5          # kaiming_uniform bound
        # PyTorch weight is (out, in); we store the transpose (in, out).
        w = jax.random.uniform(kw, (fan_in, fan_out), jnp.float32,
                               minval=-bound, maxval=bound)
        b = jax.random.uniform(kb, (1, fan_out), jnp.float32,
                               minval=0.0, maxval=0.1)
        params.append((w, b))
    return params


def _reference(x, params, activations):
    ref = x
    for (w, b), act in zip(params, activations):
        ref = ref @ w + b
        if act == "leaky_relu":
            ref = jnp.maximum(ref, 0.1 * ref)
    return ref


if __name__ == "__main__":
    # Small config consistent with the module's __init__:
    #   nodes_info     -> layer widths
    #   nonlinear_info -> per-layer nonlinearity ("leaky_relu" or None)
    #   dropout_rate   -> inference mode => identity
    nodes_info = [16, 32, 32, 8]
    nonlinear_info = ["leaky_relu", "leaky_relu", None]

    key = jax.random.PRNGKey(0)
    key, kx, kx2 = jax.random.split(key, 3)
    batch = 8
    x = jax.random.normal(kx, (batch, nodes_info[0]), jnp.float32)
    params = init_mlp_params(key, nodes_info)

    # 1) f32 path (exact check vs pure-JAX reference).
    out = jax.block_until_ready(mlp_forward(x, params, nonlinear_info))
    ref = _reference(x, params, nonlinear_info)
    assert out.shape == (batch, nodes_info[-1])
    assert jnp.allclose(out, ref, atol=1e-5, rtol=1e-5)

    # 2) bf16-matmul path (recommended on v6e/v7x); f32 accumulation, loose tol.
    out_bf16 = jax.block_until_ready(
        mlp_forward(x, params, nonlinear_info, matmul_dtype=jnp.bfloat16))
    assert out_bf16.shape == (batch, nodes_info[-1])
    assert jnp.allclose(out_bf16, ref, atol=5e-2, rtol=5e-2)

    # 3) Multi-tile grid + ragged-batch padding path (small TILE_B to exercise it).
    batch2 = 20
    x2 = jax.random.normal(kx2, (batch2, nodes_info[0]), jnp.float32)
    out2 = jax.block_until_ready(
        mlp_forward(x2, params, nonlinear_info, tile_b=8))
    ref2 = _reference(x2, params, nonlinear_info)
    assert out2.shape == (batch2, nodes_info[-1])
    assert jnp.allclose(out2, ref2, atol=1e-5, rtol=1e-5)

    print("KERNEL_OK")
</pallas_src>

<mosaic_0001>
module attributes {stable_mosaic.version = 11 : i64} {
  func.func @mlp_kernel(%arg0: i32, %arg1: memref<8x16xf32, #tpu.memory_space<vmem>>, %arg2: memref<16x32xf32, #tpu.memory_space<vmem>>, %arg3: memref<1x32xf32, #tpu.memory_space<vmem>>, %arg4: memref<32x32xf32, #tpu.memory_space<vmem>>, %arg5: memref<1x32xf32, #tpu.memory_space<vmem>>, %arg6: memref<32x128xf32, #tpu.memory_space<vmem>>, %arg7: memref<1x128xf32, #tpu.memory_space<vmem>>, %arg8: memref<8x128xf32, #tpu.memory_space<vmem>>) attributes {dimension_semantics = [#tpu.dimension_semantics<parallel>], iteration_bounds = array<i64: 1>, scalar_prefetch = 0 : i64, scratch_operands = 0 : i64, tpu.core_type = #tpu.core_type<tc>, window_params = [{transform_indices = @transform_0, window_bounds = array<i64: 8, 16>}, {pipeline_mode = #tpu.pipeline_mode<synchronous>, transform_indices = @transform_1, window_bounds = array<i64: 16, 32>}, {pipeline_mode = #tpu.pipeline_mode<synchronous>, transform_indices = @transform_2, window_bounds = array<i64: 1, 32>}, {pipeline_mode = #tpu.pipeline_mode<synchronous>, transform_indices = @transform_3, window_bounds = array<i64: 32, 32>}, {pipeline_mode = #tpu.pipeline_mode<synchronous>, transform_indices = @transform_4, window_bounds = array<i64: 1, 32>}, {pipeline_mode = #tpu.pipeline_mode<synchronous>, transform_indices = @transform_5, window_bounds = array<i64: 32, 128>}, {pipeline_mode = #tpu.pipeline_mode<synchronous>, transform_indices = @transform_6, window_bounds = array<i64: 1, 128>}, {transform_indices = @transform_7, window_bounds = array<i64: 8, 128>}]} {
    %c0 = arith.constant 0 : index
    %c0_0 = arith.constant 0 : index
    %0 = vector.load %arg1[%c0, %c0_0] : memref<8x16xf32, #tpu.memory_space<vmem>>, vector<8x16xf32>
    %c0_1 = arith.constant 0 : index
    %c0_2 = arith.constant 0 : index
    %1 = vector.load %arg2[%c0_1, %c0_2] : memref<16x32xf32, #tpu.memory_space<vmem>>, vector<16x32xf32>
    %c0_3 = arith.constant 0 : index
    %c0_4 = arith.constant 0 : index
    %2 = vector.load %arg3[%c0_3, %c0_4] : memref<1x32xf32, #tpu.memory_space<vmem>>, vector<1x32xf32>
    %cst = arith.constant dense<0.000000e+00> : vector<8x32xf32>
    %3 = tpu.matmul %0, %1, %cst {dimension_numbers = #tpu.dot_dimension_numbers<[1], [0], [0], [1], [0, 0, 1, 1], [], []>} : vector<8x16xf32>, vector<16x32xf32>, vector<8x32xf32> -> vector<8x32xf32>
    %4 = vector.broadcast %2 : vector<1x32xf32> to vector<8x32xf32>
    %5 = arith.addf %3, %4 : vector<8x32xf32>
    %cst_5 = arith.constant 1.000000e-01 : f32
    %6 = vector.broadcast %cst_5 : f32 to vector<8x32xf32>
    %7 = arith.mulf %6, %5 : vector<8x32xf32>
    %8 = arith.maximumf %5, %7 : vector<8x32xf32>
    %c0_6 = arith.constant 0 : index
    %c0_7 = arith.constant 0 : index
    %9 = vector.load %arg4[%c0_6, %c0_7] : memref<32x32xf32, #tpu.memory_space<vmem>>, vector<32x32xf32>
    %c0_8 = arith.constant 0 : index
    %c0_9 = arith.constant 0 : index
    %10 = vector.load %arg5[%c0_8, %c0_9] : memref<1x32xf32, #tpu.memory_space<vmem>>, vector<1x32xf32>
    %cst_10 = arith.constant dense<0.000000e+00> : vector<8x32xf32>
    %11 = tpu.matmul %8, %9, %cst_10 {dimension_numbers = #tpu.dot_dimension_numbers<[1], [0], [0], [1], [0, 0, 1, 1], [], []>} : vector<8x32xf32>, vector<32x32xf32>, vector<8x32xf32> -> vector<8x32xf32>
    %12 = vector.broadcast %10 : vector<1x32xf32> to vector<8x32xf32>
    %13 = arith.addf %11, %12 : vector<8x32xf32>
    %cst_11 = arith.constant 1.000000e-01 : f32
    %14 = vector.broadcast %cst_11 : f32 to vector<8x32xf32>
    %15 = arith.mulf %14, %13 : vector<8x32xf32>
    %16 = arith.maximumf %13, %15 : vector<8x32xf32>
    %c0_12 = arith.constant 0 : index
    %c0_13 = arith.constant 0 : index
    %17 = vector.load %arg6[%c0_12, %c0_13] : memref<32x128xf32, #tpu.memory_space<vmem>>, vector<32x128xf32>
    %c0_14 = arith.constant 0 : index
    %c0_15 = arith.constant 0 : index
    %18 = vector.load %arg7[%c0_14, %c0_15] : memref<1x128xf32, #tpu.memory_space<vmem>>, vector<1x128xf32>
    %cst_16 = arith.constant dense<0.000000e+00> : vector<8x128xf32>
    %19 = tpu.matmul %16, %17, %cst_16 {dimension_numbers = #tpu.dot_dimension_numbers<[1], [0], [0], [1], [0, 0, 1, 1], [], []>} : vector<8x32xf32>, vector<32x128xf32>, vector<8x128xf32> -> vector<8x128xf32>
    %20 = vector.broadcast %18 : vector<1x128xf32> to vector<8x128xf32>
    %21 = arith.addf %19, %20 : vector<8x128xf32>
    %c0_17 = arith.constant 0 : index
    %c0_18 = arith.constant 0 : index
    %22 = vector.load %arg8[%c0_17, %c0_18] : memref<8x128xf32, #tpu.memory_space<vmem>>, vector<8x128xf32>
    tpu.vector_store %arg8[%c0_17, %c0_18], %21 {strides = array<i32>} : memref<8x128xf32, #tpu.memory_space<vmem>>, vector<8x128xf32>,
    return
  }
  func.func @transform_0(%arg0: i32) -> (i32, i32) {
    %c0_i32 = arith.constant 0 : i32
    %c0_i32_0 = arith.constant 0 : i32
    return %arg0, %c0_i32 : i32, i32
  }
  func.func @transform_1(%arg0: i32) -> (i32, i32) {
    %c0_i32 = arith.constant 0 : i32
    %c0_i32_0 = arith.constant 0 : i32
    %c0_i32_1 = arith.constant 0 : i32
    return %c0_i32, %c0_i32_0 : i32, i32
  }
  func.func @transform_2(%arg0: i32) -> (i32, i32) {
    %c0_i32 = arith.constant 0 : i32
    %c0_i32_0 = arith.constant 0 : i32
    %c0_i32_1 = arith.constant 0 : i32
    return %c0_i32, %c0_i32_0 : i32, i32
  }
  func.func @transform_3(%arg0: i32) -> (i32, i32) {
    %c0_i32 = arith.constant 0 : i32
    %c0_i32_0 = arith.constant 0 : i32
    %c0_i32_1 = arith.constant 0 : i32
    return %c0_i32, %c0_i32_0 : i32, i32
  }
  func.func @transform_4(%arg0: i32) -> (i32, i32) {
    %c0_i32 = arith.constant 0 : i32
    %c0_i32_0 = arith.constant 0 : i32
    %c0_i32_1 = arith.constant 0 : i32
    return %c0_i32, %c0_i32_0 : i32, i32
  }
  func.func @transform_5(%arg0: i32) -> (i32, i32) {
    %c0_i32 = arith.constant 0 : i32
    %c0_i32_0 = arith.constant 0 : i32
    %c0_i32_1 = arith.constant 0 : i32
    return %c0_i32, %c0_i32_0 : i32, i32
  }
  func.func @transform_6(%arg0: i32) -> (i32, i32) {
    %c0_i32 = arith.constant 0 : i32
    %c0_i32_0 = arith.constant 0 : i32
    %c0_i32_1 = arith.constant 0 : i32
    return %c0_i32, %c0_i32_0 : i32, i32
  }
  func.func @transform_7(%arg0: i32) -> (i32, i32) {
    %c0_i32 = arith.constant 0 : i32
    %c0_i32_0 = arith.constant 0 : i32
    return %arg0, %c0_i32 : i32, i32
  }
}

</mosaic_0001>

<llo_original>
// kernel: tpu_custom_call.1
$region0: #{tpu_custom_call.1}
  #allocation0 [shape = 'u32[]', space=smem, size = 0x4, offset = 0x4, fixed_abs, tag = 'smem constant byte address 0x4 - core index']
  #allocation1 [shape = 'u32[72,128]{1,0:T(1,128)}', space=vmem, size = 0x9000, scoped, tag = 'internal scratch']
  %s0 = inlined_call_operand.hbm [shape: f32[8,16], index: 0, kind: input, shape index: {}]
  %s1 = inlined_call_operand.hbm [shape: f32[16,32], index: 1, kind: input, shape index: {}]
  %s2 = inlined_call_operand.vmem [shape: f32[1,32], index: 2, kind: input, shape index: {}]
  %s3 = inlined_call_operand.hbm [shape: f32[32,32], index: 3, kind: input, shape index: {}]
  %s4 = inlined_call_operand.vmem [shape: f32[1,32], index: 4, kind: input, shape index: {}]
  %s5 = inlined_call_operand.hbm [shape: f32[32,128], index: 5, kind: input, shape index: {}]
  %s6 = inlined_call_operand.vmem [shape: f32[1,128], index: 6, kind: input, shape index: {}]
  %s7 = inlined_call_operand.hbm [shape: f32[8,128], index: 7, kind: output, shape index: {}]
  %s8 = sld [smem:[#allocation0]]
  $region54: #{tpu_custom_call.1} parent=0
    _
  %s10 = ssub.s32 1, %s8
  %s11 = scalar_select 0, %s10, %s8
  $region1: #{tpu_custom_call.1} parent=0
    #allocation2 [shape = 'u8[4096]{0}', space=vmem, size = 0x1000, scoped, tag = 'input window, operand 0, single buffered']
    #allocation3 [shape = 's32[1]{0}', space=sflag, size = 0x4, scoped, tag = 'scoped memory for tpu_custom_call.1']
    #allocation4 [shape = 's32[1]{0}', space=sflag, size = 0x4, scoped, tag = 'scoped memory for tpu_custom_call.1']
    #allocation5 [shape = 'u8[8192]{0}', space=vmem, size = 0x2000, scoped, tag = 'input window, operand 1, single buffered']
    #allocation6 [shape = 's32[1]{0}', space=sflag, size = 0x4, scoped, tag = 'scoped memory for tpu_custom_call.1']
    #allocation7 [shape = 'u8[16384]{0}', space=vmem, size = 0x4000, scoped, tag = 'input window, operand 3, single buffered']
    #allocation8 [shape = 'u8[16384]{0}', space=vmem, size = 0x4000, scoped, tag = 'input window, operand 5, single buffered']
    #allocation9 [shape = 's32[1]{0}', space=sflag, size = 0x4, scoped, tag = 'scoped memory for tpu_custom_call.1']
    #allocation10 [shape = 'u8[4096]{0}', space=vmem, size = 0x1000, scoped, tag = 'output window, operand 0, single buffered']
    %12 = vsyncpa [#allocation3], 0
    %13 = vsyncpa [#allocation6], 0
    %14 = vsyncpa [#allocation9], 0
    %15 = vsyncpa [#allocation4], 0
    // Predicated region
    $region2: #{tpu_custom_call.1} parent=1 // pred_check
      _
    $region3: #{tpu_custom_call.1} parent=1 // pred_check_branch
      %17 = sbr.rel (0) target = $region5
    $region4: #{tpu_custom_call.1} parent=1 // pred_region
      %19 = vsyncadd [#allocation3], 0
      %s21 = sshll.u32 %s0, 4
      %s22 = int_to_ptr.hbm [resolvable:$true] %s21
      %s23 = sshll.u32 [#allocation2], 4
      %s24 = int_to_ptr.vmem [resolvable:$true] %s23
      %26 = dma.hbm_to_vmem [thread:$0]  %s22, 128, %s24, [#allocation3]
    $region5: #{tpu_custom_call.1} parent=1 // pred_fallthru
      _
    // Predicated region
    $region6: #{tpu_custom_call.1} parent=1 // pred_check
      _
    $region7: #{tpu_custom_call.1} parent=1 // pred_check_branch
      %28 = sbr.rel (0) target = $region9
    $region8: #{tpu_custom_call.1} parent=1 // pred_region
      %30 = vsyncadd [#allocation6], 0
      %s31 = sshll.u32 %s1, 4
      %s32 = int_to_ptr.hbm [resolvable:$true] %s31
      %s33 = sshll.u32 [#allocation5], 4
      %s34 = int_to_ptr.vmem [resolvable:$true] %s33
      %39 = dma.hbm_to_vmem [thread:$0]  %s32, 256, %s34, [#allocation6], 128, 128, 8
    $region9: #{tpu_custom_call.1} parent=1 // pred_fallthru
      _
    // Predicated region
    $region10: #{tpu_custom_call.1} parent=1 // pred_check
      _
    $region11: #{tpu_custom_call.1} parent=1 // pred_check_branch
      %41 = sbr.rel (0) target = $region13
    $region12: #{tpu_custom_call.1} parent=1 // pred_region
      _
    $region13: #{tpu_custom_call.1} parent=1 // pred_fallthru
      _
    // Predicated region
    $region14: #{tpu_custom_call.1} parent=1 // pred_check
      _
    $region15: #{tpu_custom_call.1} parent=1 // pred_check_branch
      %43 = sbr.rel (0) target = $region17
    $region16: #{tpu_custom_call.1} parent=1 // pred_region
      %45 = vsyncadd [#allocation6], 0
      %s46 = sshll.u32 %s3, 4
      %s47 = int_to_ptr.hbm [resolvable:$true] %s46
      %s48 = sshll.u32 [#allocation7], 4
      %s49 = int_to_ptr.vmem [resolvable:$true] %s48
      %54 = dma.hbm_to_vmem [thread:$0]  %s47, 512, %s49, [#allocation6], 128, 128, 8
    $region17: #{tpu_custom_call.1} parent=1 // pred_fallthru
      _
    // Predicated region
    $region18: #{tpu_custom_call.1} parent=1 // pred_check
      _
    $region19: #{tpu_custom_call.1} parent=1 // pred_check_branch
      %56 = sbr.rel (0) target = $region21
    $region20: #{tpu_custom_call.1} parent=1 // pred_region
      _
    $region21: #{tpu_custom_call.1} parent=1 // pred_fallthru
      _
    // Predicated region
    $region22: #{tpu_custom_call.1} parent=1 // pred_check
      _
    $region23: #{tpu_custom_call.1} parent=1 // pred_check_branch
      %58 = sbr.rel (0) target = $region25
    $region24: #{tpu_custom_call.1} parent=1 // pred_region
      %60 = vsyncadd [#allocation9], 0
      %s61 = sshll.u32 %s5, 4
      %s62 = int_to_ptr.hbm [resolvable:$true] %s61
      %s63 = sshll.u32 [#allocation8], 4
      %s64 = int_to_ptr.vmem [resolvable:$true] %s63
      %69 = dma.hbm_to_vmem [thread:$0]  %s62, 512, %s64, [#allocation9], 128, 128, 8
    $region25: #{tpu_custom_call.1} parent=1 // pred_fallthru
      _
    // Predicated region
    $region26: #{tpu_custom_call.1} parent=1 // pred_check
      _
    $region27: #{tpu_custom_call.1} parent=1 // pred_check_branch
      %71 = sbr.rel (0) target = $region29
    $region28: #{tpu_custom_call.1} parent=1 // pred_region
      _
    $region29: #{tpu_custom_call.1} parent=1 // pred_fallthru
      _
    // Predicated region
    $region30: #{tpu_custom_call.1} parent=1 // pred_check
      _
    $region31: #{tpu_custom_call.1} parent=1 // pred_check_branch
      %73 = sbr.rel (0) target = $region33
    $region32: #{tpu_custom_call.1} parent=1 // pred_region
      %75 = dma.done [#allocation3], 128
    $region33: #{tpu_custom_call.1} parent=1 // pred_fallthru
      _
    // Predicated region
    $region34: #{tpu_custom_call.1} parent=1 // pred_check
      _
    $region35: #{tpu_custom_call.1} parent=1 // pred_check_branch
      %77 = sbr.rel (0) target = $region37
    $region36: #{tpu_custom_call.1} parent=1 // pred_region
      %79 = dma.done [#allocation6], 256
    $region37: #{tpu_custom_call.1} parent=1 // pred_fallthru
      _
    // Predicated region
    $region38: #{tpu_custom_call.1} parent=1 // pred_check
      _
    $region39: #{tpu_custom_call.1} parent=1 // pred_check_branch
      %81 = sbr.rel (0) target = $region41
    $region40: #{tpu_custom_call.1} parent=1 // pred_region
      %83 = dma.done [#allocation6], 512
    $region41: #{tpu_custom_call.1} parent=1 // pred_fallthru
      _
    // Predicated region
    $region42: #{tpu_custom_call.1} parent=1 // pred_check
      _
    $region43: #{tpu_custom_call.1} parent=1 // pred_check_branch
      %85 = sbr.rel (0) target = $region45
    $region44: #{tpu_custom_call.1} parent=1 // pred_region
      %87 = dma.done [#allocation9], 512
    $region45: #{tpu_custom_call.1} parent=1 // pred_fallthru
      _
    %v88 = vld [vmem:[#allocation2] sm:$0xff]
    %v89 = vld [vmem:[#allocation5] sm:$0xff]
    %v90 = vld [vmem:[#allocation5 + $0x8] sm:$0xff]
    %v91 = vld [vmem:[%s2] sm:$0x1]
    %v93 = vperm.slane %v91, 0
    %vm95 = vcmask 130048
    %v97 = vsel %vm95, %v88, 0
    %99 = vmatpush.msra.mxu0 0.0
    %100 = vmatpush.msra.mxu0 0.0
    %101 = vmatpush.msra.mxu0 0.0
    %102 = vmatpush.msra.mxu0 0.0
    %103 = vmatpush.msra.mxu0 0.0
    %104 = vmatpush.msra.mxu0 0.0
    %105 = vmatpush.msra.mxu0 0.0
    %106 = vmatpush.msra.mxu0 0.0
    %107 = vmatpush.msra.mxu0 0.0
    %108 = vmatpush.msra.mxu0 0.0
    %109 = vmatpush.msra.mxu0 0.0
    %110 = vmatpush.msra.mxu0 0.0
    %111 = vmatpush.msra.mxu0 0.0
    %112 = vmatpush.msra.mxu0 0.0
    %113 = vmatpush.msra.mxu0 %v90
    %114 = vmatpush.msra.mxu0 %v89
    %115 = vmatmul.f32.gmra.mxu0 %v97
    %v116 = vpop.f32.mrf.mxu0
    %v117 = vadd.f32 %v93, %v116
    %118 = vdwg.mxu0
    %v119 = vmul.f32 %v117, 0.1
    %v120 = vmax.f32 %v117, %v119
    %v121 = vld [vmem:[#allocation7] sm:$0xff]
    %v122 = vld [vmem:[#allocation7 + $0x8] sm:$0xff]
    %v123 = vld [vmem:[#allocation7 + $0x10] sm:$0xff]
    %v124 = vld [vmem:[#allocation7 + $0x18] sm:$0xff]
    %v125 = vld [vmem:[%s4] sm:$0x1]
    %v127 = vperm.slane %v125, 0
    %vm129 = vcmask 261120
    %v131 = vsel %vm129, %v120, 0
    %133 = vmatpush.msra.mxu0 0.0
    %134 = vmatpush.msra.mxu0 0.0
    %135 = vmatpush.msra.mxu0 0.0
    %136 = vmatpush.msra.mxu0 0.0
    %137 = vmatpush.msra.mxu0 0.0
    %138 = vmatpush.msra.mxu0 0.0
    %139 = vmatpush.msra.mxu0 0.0
    %140 = vmatpush.msra.mxu0 0.0
    %141 = vmatpush.msra.mxu0 0.0
    %142 = vmatpush.msra.mxu0 0.0
    %143 = vmatpush.msra.mxu0 0.0
    %144 = vmatpush.msra.mxu0 0.0
    %145 = vmatpush.msra.mxu0 %v124
    %146 = vmatpush.msra.mxu0 %v123
    %147 = vmatpush.msra.mxu0 %v122
    %148 = vmatpush.msra.mxu0 %v121
    %149 = vmatmul.f32.gmra.mxu0 %v131
    %v150 = vpop.f32.mrf.mxu0
    %v151 = vadd.f32 %v127, %v150
    %152 = vdwg.mxu0
    %v153 = vmul.f32 %v151, 0.1
    %v154 = vmax.f32 %v151, %v153
    %v155 = vld [vmem:[#allocation8] sm:$0xff]
    %v156 = vld [vmem:[#allocation8 + $0x8] sm:$0xff]
    %v157 = vld [vmem:[#allocation8 + $0x10] sm:$0xff]
    %v158 = vld [vmem:[#allocation8 + $0x18] sm:$0xff]
    %v159 = vld [vmem:[%s6] sm:$0x1]
    %v161 = vperm.slane %v159, 0
    %v164 = vsel %vm129, %v154, 0
    %166 = vmatpush.msra.mxu0 0.0
    %167 = vmatpush.msra.mxu0 0.0
    %168 = vmatpush.msra.mxu0 0.0
    %169 = vmatpush.msra.mxu0 0.0
    %170 = vmatpush.msra.mxu0 0.0
    %171 = vmatpush.msra.mxu0 0.0
    %172 = vmatpush.msra.mxu0 0.0
    %173 = vmatpush.msra.mxu0 0.0
    %174 = vmatpush.msra.mxu0 0.0
    %175 = vmatpush.msra.mxu0 0.0
    %176 = vmatpush.msra.mxu0 0.0
    %177 = vmatpush.msra.mxu0 0.0
    %178 = vmatpush.msra.mxu0 %v158
    %179 = vmatpush.msra.mxu0 %v157
    %180 = vmatpush.msra.mxu0 %v156
    %181 = vmatpush.msra.mxu0 %v155
    %182 = vmatmul.f32.gmra.mxu0 %v164
    %v183 = vpop.f32.mrf.mxu0
    %v184 = vadd.f32 %v161, %v183
    %185 = vdwg.mxu0
    %186 = vst [vmem:[#allocation10] sm:$0xff] %v184
    // Predicated region
    $region46: #{tpu_custom_call.1} parent=1 // pred_check
      _
    $region47: #{tpu_custom_call.1} parent=1 // pred_check_branch
      %188 = sbr.rel (0) target = $region49
    $region48: #{tpu_custom_call.1} parent=1 // pred_region
      %190 = vsyncadd [#allocation4], 0
      %s192 = sshll.u32 [#allocation10], 4
      %s193 = int_to_ptr.vmem [resolvable:$true] %s192
      %s194 = sshll.u32 %s7, 4
      %s195 = int_to_ptr.hbm [resolvable:$true] %s194
      %197 = dma.vmem_to_hbm [thread:$0]  %s193, 128, %s195, [#allocation4]
    $region49: #{tpu_custom_call.1} parent=1 // pred_fallthru
      _
    // Predicated region
    $region50: #{tpu_custom_call.1} parent=1 // pred_check
      _
    $region51: #{tpu_custom_call.1} parent=1 // pred_check_branch
      %199 = sbr.rel (0) target = $region53
    $region52: #{tpu_custom_call.1} parent=1 // pred_region
      %201 = dma.done [#allocation4], 128
    $region53: #{tpu_custom_call.1} parent=1 // pred_fallthru
      _
    %202 = vsyncpa [#allocation3], 1
    %203 = vsyncpa [#allocation6], 1
    %204 = vsyncpa [#allocation9], 1
    %205 = vsyncpa [#allocation4], 1

</llo_original>
